<compile_context>
chip_gen: v7x
topology: tpu7x:2x2x1
jax: 0.10.0
libtpu: 0.0.40
codegen_flags: <defaults>
</compile_context>

<pallas_src>
import math
from functools import partial

import jax
import jax.numpy as jnp
from jax.experimental import pallas as pl
from jax.experimental.pallas import tpu as pltpu


# Total double-buffered VMEM budget (outputs + resident B tables); v5e-safe.
_TOTAL_VMEM_BUDGET = 12 * 1024 * 1024


def _round_up(x, m):
    return ((x + m - 1) // m) * m


def _rotary_packed_kernel(t_per_tile, inv_ref, cosb_ref, sinb_ref, cos_ref, sin_ref):
    """Slab layout: each slab row packs k consecutive sequence rows of width dim.

    inv_ref  : (1, kd)       f32  = tile(cat([inv_freq, inv_freq]), k)
    cosb/sinb: (ts_rows, kd) f32  = cos/sin of tile-local angles B (tile-invariant)
    cos/sin  : (ts_rows, kd)      outputs
    angle = A + B with A = tile_base * inv (one row of transcendentals per tile).
    """
    a = (pl.program_id(0) * t_per_tile).astype(jnp.float32) * inv_ref[...]
    cos_a = jnp.cos(a)                       # (1, kd) -- only EUP work per tile
    sin_a = jnp.sin(a)
    cb = cosb_ref[...]
    sb = sinb_ref[...]
    cos_ref[...] = (cos_a * cb - sin_a * sb).astype(cos_ref.dtype)
    sin_ref[...] = (sin_a * cb + cos_a * sb).astype(sin_ref.dtype)


def _rotary_half_kernel(t_per_tile, inv_ref, cosb_ref, sinb_ref, cos_ref, sin_ref):
    """dim % 256 == 0: combine on dim/2 lanes, duplicate into both output halves."""
    half = cos_ref.shape[1] // 2
    a = (pl.program_id(0) * t_per_tile).astype(jnp.float32) * inv_ref[...]
    cos_a = jnp.cos(a)                       # (1, dim/2)
    sin_a = jnp.sin(a)
    cb = cosb_ref[...]
    sb = sinb_ref[...]
    c = (cos_a * cb - sin_a * sb).astype(cos_ref.dtype)
    s = (sin_a * cb + cos_a * sb).astype(sin_ref.dtype)
    cos_ref[:, :half] = c
    cos_ref[:, half:] = c
    sin_ref[:, :half] = s
    sin_ref[:, half:] = s


def rotary_embedding(x, seq_len, dim, base=10000.0, out_dtype=jnp.bfloat16,
                     tile_rows=None):
    """Returns (cos, sin), each (seq_len, dim) in `out_dtype`.

    Default is bf16 (the kernel is HBM-writeback bound; bf16 halves bytes).
    Pass out_dtype=jnp.float32 for strict parity with the PyTorch module.
    `x` is accepted only for API parity (the module uses it for .device only).
    """
    del x
    assert dim % 2 == 0, "RotaryEmbedding requires an even dim"
    assert 1 <= seq_len <= (1 << 24), "row indices must stay exact in float32"

    inv_freq = 1.0 / (base ** (jnp.arange(0, dim, 2, dtype=jnp.float32) / dim))
    itemsize = jnp.dtype(out_dtype).itemsize

    if dim % 256 == 0:
        # Half-compute path: combine on dim/2 lanes (already lane dense).
        k, kd, kdw = 1, dim, dim // 2
        kernel_fn = _rotary_half_kernel
        inv_b = inv_freq                                       # (kdw,)
        grp = jnp.zeros((kdw,), jnp.int32)
        inv_row = inv_freq.reshape(1, kdw)
    else:
        # Lane packing: k consecutive rows per slab row so kd % 128 == 0.
        k = math.lcm(dim, 128) // dim
        kd = kdw = k * dim
        kernel_fn = _rotary_packed_kernel
        inv_b = jnp.tile(jnp.concatenate([inv_freq, inv_freq]), (k,))   # (kd,)
        grp = jnp.arange(kd, dtype=jnp.int32) // dim           # packed-row of a lane
        inv_row = inv_b.reshape(1, kd)

    slab_rows = -(-seq_len // k)                               # ceil

    if tile_rows is not None:
        assert tile_rows > 0 and tile_rows % 8 == 0
        ts_rows = tile_rows
    else:
        # Per slab row of double-buffered VMEM: two f32 B tables + two outputs.
        bytes_per_row = 2 * 2 * 4 * kdw + 2 * 2 * itemsize * kd
        ts_rows = max(8, (_TOTAL_VMEM_BUDGET // bytes_per_row) // 8 * 8)
        # v7x: keep >= 2 grid iterations so ("parallel",) spans both TCs.
        if slab_rows >= 16:
            ts_rows = min(ts_rows, _round_up(-(-slab_rows // 2), 8))
    if ts_rows >= slab_rows:
        ts_rows = slab_rows     # single block; rows == full array dim is legal
    grid_n = -(-slab_rows // ts_rows)

    # Tile-local angles B = (r*k + grp) * inv -- identical for every grid tile,
    # so the transcendentals for them run exactly once (here, tile-sized).
    local_t = (jnp.arange(ts_rows, dtype=jnp.int32)[:, None] * k
               + grp[None, :]).astype(jnp.float32)
    b_ang = local_t * inv_b[None, :]
    cos_b = jnp.cos(b_ang)
    sin_b = jnp.sin(b_ang)

    def const_spec(shape):
        return pl.BlockSpec(shape, lambda i: (0, 0))

    in_specs = [const_spec((1, kdw)),
                const_spec((ts_rows, kdw)),
                const_spec((ts_rows, kdw))]
    out_spec = pl.BlockSpec((ts_rows, kd), lambda i: (i, 0))
    out_shape = (jax.ShapeDtypeStruct((slab_rows, kd), out_dtype),
                 jax.ShapeDtypeStruct((slab_rows, kd), out_dtype))

    cost = pl.CostEstimate(
        flops=6 * slab_rows * kd,                              # 4 mul + 2 add / elem
        transcendentals=2 * grid_n * kdw,                      # A row per tile
        bytes_accessed=2 * slab_rows * kd * itemsize + (2 * ts_rows + 1) * kdw * 4,
    )

    cos_slab, sin_slab = pl.pallas_call(
        partial(kernel_fn, ts_rows * k),
        out_shape=out_shape,
        grid=(grid_n,),
        in_specs=in_specs,
        out_specs=(out_spec, out_spec),
        compiler_params=pltpu.CompilerParams(dimension_semantics=("parallel",)),
        cost_estimate=cost,
    )(inv_row, cos_b, sin_b)

    # Slab -> (seq_len, dim): row-major reshape is a free view.
    cos = cos_slab.reshape(-1, dim)
    sin = sin_slab.reshape(-1, dim)
    if cos.shape[0] != seq_len:
        # Only when seq_len % k != 0: this trailing slice is a real XLA copy of
        # the table.  Prefer seq lengths that are multiples of k, or consume
        # the padded slab directly in a fused consumer.
        cos = cos[:seq_len]
        sin = sin[:seq_len]
    return cos, sin


def _reference(seq_len, dim, base=10000.0):
    inv_freq = 1.0 / (base ** (jnp.arange(0, dim, 2, dtype=jnp.float32) / dim))
    t = jnp.arange(seq_len, dtype=jnp.float32)
    freqs = jnp.einsum("i,j->ij", t, inv_freq)
    emb = jnp.concatenate([freqs, freqs], axis=-1)
    return jnp.cos(emb), jnp.sin(emb)


if __name__ == "__main__":
    key = jax.random.PRNGKey(0)
    batch, seq_len, dim = 2, 8, 32
    # x is only used for device placement in the original module.
    x = jax.random.normal(key, (batch, seq_len, dim), dtype=jnp.float32)

    # Strict f32 parity path (matches the PyTorch module).  Tolerances are a
    # few ulp looser than bitwise because of the angle-addition factorization.
    cos, sin = rotary_embedding(x, seq_len=seq_len, dim=dim, out_dtype=jnp.float32)
    jax.block_until_ready((cos, sin))
    cr, sr = _reference(seq_len, dim)
    assert cos.shape == (seq_len, dim) and sin.shape == (seq_len, dim)
    assert jnp.allclose(cos, cr, atol=2e-5, rtol=2e-5)
    assert jnp.allclose(sin, sr, atol=2e-5, rtol=2e-5)

    # Multi-tile grid + ragged last block (grid=2 via tile_rows=8), no padding copy.
    c2, s2 = rotary_embedding(x, seq_len=40, dim=32, out_dtype=jnp.float32, tile_rows=8)
    jax.block_until_ready((c2, s2))
    c2r, s2r = _reference(40, 32)
    assert c2.shape == (40, 32) and s2.shape == (40, 32)
    assert jnp.allclose(c2, c2r, atol=2e-5, rtol=2e-5)
    assert jnp.allclose(s2, s2r, atol=2e-5, rtol=2e-5)

    # Half-compute path (dim % 256 == 0); also exercises the >=2-tile split.
    c3, s3 = rotary_embedding(x, seq_len=16, dim=256, out_dtype=jnp.float32)
    jax.block_until_ready((c3, s3))
    c3r, s3r = _reference(16, 256)
    assert c3.shape == (16, 256) and s3.shape == (16, 256)
    assert jnp.allclose(c3, c3r, atol=2e-5, rtol=2e-5)
    assert jnp.allclose(s3, s3r, atol=2e-5, rtol=2e-5)

    # seq_len not a multiple of the lane-packing factor (documented slice path).
    c4, s4 = rotary_embedding(x, seq_len=37, dim=32, out_dtype=jnp.float32)
    jax.block_until_ready((c4, s4))
    c4r, s4r = _reference(37, 32)
    assert c4.shape == (37, 32) and s4.shape == (37, 32)
    assert jnp.allclose(c4, c4r, atol=2e-5, rtol=2e-5)
    assert jnp.allclose(s4, s4r, atol=2e-5, rtol=2e-5)

    # Default bf16 output on a larger shape (multi-tile, TC-shardable grid).
    c5, s5 = rotary_embedding(x, seq_len=1024, dim=64)
    jax.block_until_ready((c5, s5))
    c5r, s5r = _reference(1024, 64)
    assert c5.dtype == jnp.bfloat16 and s5.dtype == jnp.bfloat16
    assert c5.shape == (1024, 64) and s5.shape == (1024, 64)
    assert jnp.allclose(c5.astype(jnp.float32), c5r, atol=5e-3)
    assert jnp.allclose(s5.astype(jnp.float32), s5r, atol=5e-3)

    print("KERNEL_OK")
</pallas_src>

<mosaic_0001>
module attributes {stable_mosaic.version = 11 : i64} {
  func.func @_rotary_packed_kernel(%arg0: i32, %arg1: memref<1x128xf32, #tpu.memory_space<vmem>>, %arg2: memref<2x128xf32, #tpu.memory_space<vmem>>, %arg3: memref<2x128xf32, #tpu.memory_space<vmem>>, %arg4: memref<2x128xf32, #tpu.memory_space<vmem>>, %arg5: memref<2x128xf32, #tpu.memory_space<vmem>>) attributes {dimension_semantics = [#tpu.dimension_semantics<parallel>], iteration_bounds = array<i64: 1>, scalar_prefetch = 0 : i64, scratch_operands = 0 : i64, tpu.core_type = #tpu.core_type<tc>, window_params = [{pipeline_mode = #tpu.pipeline_mode<synchronous>, transform_indices = @transform_0, window_bounds = array<i64: 1, 128>}, {pipeline_mode = #tpu.pipeline_mode<synchronous>, transform_indices = @transform_1, window_bounds = array<i64: 2, 128>}, {pipeline_mode = #tpu.pipeline_mode<synchronous>, transform_indices = @transform_2, window_bounds = array<i64: 2, 128>}, {transform_indices = @transform_3, window_bounds = array<i64: 2, 128>}, {transform_indices = @transform_4, window_bounds = array<i64: 2, 128>}]} {
    %c8_i32 = arith.constant 8 : i32
    %0 = arith.muli %arg0, %c8_i32 : i32
    %1 = arith.sitofp %0 : i32 to f32
    %c0 = arith.constant 0 : index
    %c0_0 = arith.constant 0 : index
    %2 = vector.load %arg1[%c0, %c0_0] : memref<1x128xf32, #tpu.memory_space<vmem>>, vector<1x128xf32>
    %3 = vector.broadcast %1 : f32 to vector<1x128xf32>
    %4 = arith.mulf %3, %2 : vector<1x128xf32>
    %5 = math.cos %4 : vector<1x128xf32>
    %6 = math.sin %4 : vector<1x128xf32>
    %c0_1 = arith.constant 0 : index
    %c0_2 = arith.constant 0 : index
    %7 = vector.load %arg2[%c0_1, %c0_2] : memref<2x128xf32, #tpu.memory_space<vmem>>, vector<2x128xf32>
    %c0_3 = arith.constant 0 : index
    %c0_4 = arith.constant 0 : index
    %8 = vector.load %arg3[%c0_3, %c0_4] : memref<2x128xf32, #tpu.memory_space<vmem>>, vector<2x128xf32>
    %9 = vector.broadcast %5 : vector<1x128xf32> to vector<2x128xf32>
    %10 = arith.mulf %9, %7 : vector<2x128xf32>
    %11 = vector.broadcast %6 : vector<1x128xf32> to vector<2x128xf32>
    %12 = arith.mulf %11, %8 : vector<2x128xf32>
    %13 = arith.subf %10, %12 : vector<2x128xf32>
    %c0_5 = arith.constant 0 : index
    %c0_6 = arith.constant 0 : index
    %14 = vector.load %arg4[%c0_5, %c0_6] : memref<2x128xf32, #tpu.memory_space<vmem>>, vector<2x128xf32>
    tpu.vector_store %arg4[%c0_5, %c0_6], %13 {strides = array<i32>} : memref<2x128xf32, #tpu.memory_space<vmem>>, vector<2x128xf32>,
    %15 = vector.broadcast %6 : vector<1x128xf32> to vector<2x128xf32>
    %16 = arith.mulf %15, %7 : vector<2x128xf32>
    %17 = vector.broadcast %5 : vector<1x128xf32> to vector<2x128xf32>
    %18 = arith.mulf %17, %8 : vector<2x128xf32>
    %19 = arith.addf %16, %18 : vector<2x128xf32>
    %c0_7 = arith.constant 0 : index
    %c0_8 = arith.constant 0 : index
    %20 = vector.load %arg5[%c0_7, %c0_8] : memref<2x128xf32, #tpu.memory_space<vmem>>, vector<2x128xf32>
    tpu.vector_store %arg5[%c0_7, %c0_8], %19 {strides = array<i32>} : memref<2x128xf32, #tpu.memory_space<vmem>>, vector<2x128xf32>,
    return
  }
  func.func @transform_0(%arg0: i32) -> (i32, i32) {
    %c0_i32 = arith.constant 0 : i32
    %c0_i32_0 = arith.constant 0 : i32
    %c0_i32_1 = arith.constant 0 : i32
    return %c0_i32, %c0_i32_0 : i32, i32
  }
  func.func @transform_1(%arg0: i32) -> (i32, i32) {
    %c0_i32 = arith.constant 0 : i32
    %c0_i32_0 = arith.constant 0 : i32
    %c0_i32_1 = arith.constant 0 : i32
    return %c0_i32, %c0_i32_0 : i32, i32
  }
  func.func @transform_2(%arg0: i32) -> (i32, i32) {
    %c0_i32 = arith.constant 0 : i32
    %c0_i32_0 = arith.constant 0 : i32
    %c0_i32_1 = arith.constant 0 : i32
    return %c0_i32, %c0_i32_0 : i32, i32
  }
  func.func @transform_3(%arg0: i32) -> (i32, i32) {
    %c0_i32 = arith.constant 0 : i32
    %c0_i32_0 = arith.constant 0 : i32
    return %arg0, %c0_i32 : i32, i32
  }
  func.func @transform_4(%arg0: i32) -> (i32, i32) {
    %c0_i32 = arith.constant 0 : i32
    %c0_i32_0 = arith.constant 0 : i32
    return %arg0, %c0_i32 : i32, i32
  }
}

</mosaic_0001>

<llo_original>
// kernel: tpu_custom_call.1
$region0: #{tpu_custom_call.1}
  #allocation0 [shape = 'u32[]', space=smem, size = 0x4, offset = 0x4, fixed_abs, tag = 'smem constant byte address 0x4 - core index']
  #allocation1 [shape = 'u32[144,128]{1,0:T(1,128)}', space=vmem, size = 0x12000, scoped, tag = 'internal scratch']
  %s0 = inlined_call_operand.hbm [shape: f32[1,128], index: 0, kind: input, shape index: {}]
  %s1 = inlined_call_operand.vmem [shape: f32[2,128], index: 1, kind: input, shape index: {}]
  %s2 = inlined_call_operand.vmem [shape: f32[2,128], index: 2, kind: input, shape index: {}]
  %s3 = inlined_call_operand.hbm [shape: f32[2,128], index: 3, kind: output, shape index: {0}]
  %s4 = inlined_call_operand.hbm [shape: f32[2,128], index: 4, kind: output, shape index: {1}]
  %5 = xla_tuple %s3, %s4
  %s6 = sld [smem:[#allocation0]]
  $region34: #{tpu_custom_call.1} parent=0
    _
  %s8 = ssub.s32 1, %s6
  %s9 = scalar_select 0, %s8, %s6
  $region1: #{tpu_custom_call.1} parent=0
    #allocation2 [shape = 'u8[512]{0}', space=vmem, size = 0x400, scoped, tag = 'input window, operand 0, single buffered']
    #allocation3 [shape = 's32[1]{0}', space=sflag, size = 0x4, scoped, tag = 'scoped memory for tpu_custom_call.1']
    #allocation4 [shape = 's32[1]{0}', space=sflag, size = 0x4, scoped, tag = 'scoped memory for tpu_custom_call.1']
    #allocation5 [shape = 'u8[1024]{0}', space=vmem, size = 0x400, scoped, tag = 'output window, operand 0, single buffered']
    #allocation6 [shape = 'u8[1024]{0}', space=vmem, size = 0x400, scoped, tag = 'output window, operand 1, single buffered']
    #allocation7 [shape = 's32[1]{0}', space=sflag, size = 0x4, scoped, tag = 'scoped memory for tpu_custom_call.1']
    %10 = vsyncpa [#allocation3], 0
    %11 = vsyncpa [#allocation4], 0
    %12 = vsyncpa [#allocation7], 0
    // Predicated region
    $region2: #{tpu_custom_call.1} parent=1 // pred_check
      _
    $region3: #{tpu_custom_call.1} parent=1 // pred_check_branch
      %14 = sbr.rel (0) target = $region5
    $region4: #{tpu_custom_call.1} parent=1 // pred_region
      %s16 = ssub.s32 16, 16
      %17 = vsyncadd [#allocation3], %s16
      %s19 = sshll.u32 [#allocation2], 4
      %s20 = int_to_ptr.vmem [resolvable:$true] %s19
      %22 = dma.hbm_to_vmem [thread:$0]  %s0, 16, %s20, [#allocation3]
    $region5: #{tpu_custom_call.1} parent=1 // pred_fallthru
      _
    // Predicated region
    $region6: #{tpu_custom_call.1} parent=1 // pred_check
      _
    $region7: #{tpu_custom_call.1} parent=1 // pred_check_branch
      %24 = sbr.rel (0) target = $region9
    $region8: #{tpu_custom_call.1} parent=1 // pred_region
      _
    $region9: #{tpu_custom_call.1} parent=1 // pred_fallthru
      _
    // Predicated region
    $region10: #{tpu_custom_call.1} parent=1 // pred_check
      _
    $region11: #{tpu_custom_call.1} parent=1 // pred_check_branch
      %26 = sbr.rel (0) target = $region13
    $region12: #{tpu_custom_call.1} parent=1 // pred_region
      _
    $region13: #{tpu_custom_call.1} parent=1 // pred_fallthru
      _
    // Predicated region
    $region14: #{tpu_custom_call.1} parent=1 // pred_check
      _
    $region15: #{tpu_custom_call.1} parent=1 // pred_check_branch
      %28 = sbr.rel (0) target = $region17
    $region16: #{tpu_custom_call.1} parent=1 // pred_region
      %29 = dma.done [#allocation3], 16
    $region17: #{tpu_custom_call.1} parent=1 // pred_fallthru
      _
    %s30 = smul.u32 0, 8
    %s31 = scvt.s32.f32 %s30
    %v32 = vld [vmem:[#allocation2] sm:$0x1]
    %v33 = vstv %s31
    %v34 = vmul.f32 %v33, %v32
    %v35 = vand.u32 2147483647, %v34
    %vm36 = vcmp.le.f32.partialorder %v35, 0.7853982
    %vm37 = vcmp.lt.s32.totalorder %v34, 0
    %v38 = vand.u32 %v34, 2139095040
    %v39 = vshrl.u32 %v38, 23
    %v40 = vsub.s32 %v39, 127
    %v41 = vand.u32 2147483647, %v34
    %v42 = vand.u32 %v41, 8388607
    %v43 = vor.u32 %v42, 8388608
    %v44 = vsub.s32 0, %v43
    %v45 = vadd.s32 %v40, 1
    %vm46 = vcmp.gt.s32.totalorder %v45, 0
    %v47 = vsel %vm46, %v45, 0
    %v48 = vshrl.u32 %v47, 5
    %v49 = vand.u32 %v47, 31
    %v50 = vsub.s32 32, %v49
    %v51 = vshrl.u32 683565275, %v50
    %v52 = vshll.u32 683565275, %v49
    %v53 = vshrl.u32 2475754826, %v50
    %v54 = vor.u32 %v52, %v53
    %v55 = vshll.u32 2475754826, %v49
    %v56 = vshrl.u32 2131351028, %v50
    %v57 = vor.u32 %v55, %v56
    %v58 = vshll.u32 2131351028, %v49
    %v59 = vshrl.u32 2102212464, %v50
    %v60 = vor.u32 %v58, %v59
    %v61 = vshll.u32 2102212464, %v49
    %v62 = vshrl.u32 920167782, %v50
    %v63 = vor.u32 %v61, %v62
    %v64 = vshll.u32 920167782, %v49
    %v65 = vshrl.u32 1326507024, %v50
    %v66 = vor.u32 %v64, %v65
    %vm67 = vcmp.lt.s32.totalorder %v48, 1
    %vm68 = vcmp.lt.s32.totalorder %v48, 2
    %vm69 = vcmp.lt.s32.totalorder %v48, 3
    %vm70 = vcmp.lt.s32.totalorder %v48, 4
    %v71 = vsel %vm67, %v51, %v54
    %v72 = vsel %vm70, %v60, 2102212464
    %v73 = vsel %vm69, %v57, %v72
    %v74 = vsel %vm68, %v71, %v73
    %v75 = vsel %vm67, %v54, %v57
    %v76 = vsel %vm70, %v63, 920167782
    %v77 = vsel %vm69, %v60, %v76
    %v78 = vsel %vm68, %v75, %v77
    %v79 = vsel %vm67, %v57, %v60
    %v80 = vsel %vm70, %v66, 1326507024
    %v81 = vsel %vm69, %v63, %v80
    %v82 = vsel %vm68, %v79, %v81
    %v83 = vshll.u32 %v43, 8
    %v84 = vmul.u32.u64.compose %v83, %v82
    %v85 = vextract.low.u32 %v84
    %v86 = vextract.high.u32 %v84
    %v87 = vmul.u32.u64.compose %v83, %v78
    %v88 = vextract.low.u32 %v87
    %v89 = vextract.high.u32 %v87
    %v90 = vmul.u32 %v83, %v74
    %v91 = vadd.s32 %v86, %v88
    %vm92 = vc.u32 %v86, %v88
    %v93 = vadd.s32 %v89, 1
    %v94 = vsel %vm92, %v93, %v89
    %v95 = vadd.s32 %v90, %v94
    %v96 = vadd.s32 %v95, 536870912
    %v97 = vshrl.u32 %v96, 30
    %v98 = vshll.u32 %v97, 30
    %v99 = vsub.s32 %v95, %v98
    %vm100 = vcmp.lt.s32.totalorder %v99, 0
    %v101 = vsub.s32 0, %v99
    %v102 = vsel %vm100, %v101, %v99
    %v103 = vclz %v102
    %v104 = vsub.s32 %v103, 2
    %vm105 = vcmp.gt.s32.totalorder 0, %v104
    %v106 = vsel %vm105, 0, %v104
    %v107 = vsub.s32 32, %v106
    %v108 = vshll.u32 %v99, %v106
    %v109 = vshrl.u32 %v91, %v107
    %v110 = vor.u32 %v108, %v109
    %v111 = vsub.s32 4294967266, %v106
    %v112 = vadd.s32 %v111, 127
    %v113 = vshll.u32 %v112, 23
    %v114 = vor.u32 4788187, %v113
    %v115 = vand.u32 2147483647, %v114
    %v117 = vcvt.s32.f32 %v110
    %v118 = vmul.f32 %v117, %v115
    %v119 = vxor.u32 %v118, 2147483648
    %v120 = vsel %vm37, %v119, %v118
    %v121 = vsub.s32 4, %v97
    %v122 = vsel %vm37, %v121, %v97
    %v123 = vsel %vm36, %v34, %v120
    %v124 = vsel %vm36, 0, %v122
    %v125 = vcosq.f32.pop %v123
    %v126 = vsinq.f32.pop %v123
    %vm127 = vweird.f32 %v34
    %v128 = vand.u32 %v124, 3
    %vm129 = vcmp.lt.s32.totalorder %v128, 2
    %vm130 = vcmp.eq.s32.totalorder %v128, 0
    %v131 = vxor.u32 %v126, 2147483648
    %v132 = vsel %vm130, %v125, %v131
    %vm133 = vcmp.eq.s32.totalorder %v128, 2
    %v134 = vxor.u32 %v125, 2147483648
    %v135 = vsel %vm133, %v134, %v126
    %v136 = vsel %vm129, %v132, %v135
    %v137 = vsel %vm127, nan, %v136
    %v138 = vand.u32 2147483647, %v34
    %vm139 = vcmp.le.f32.partialorder %v138, 0.7853982
    %vm140 = vcmp.lt.s32.totalorder %v34, 0
    %v141 = vand.u32 %v34, 2139095040
    %v142 = vshrl.u32 %v141, 23
    %v143 = vsub.s32 %v142, 127
    %v144 = vand.u32 2147483647, %v34
    %v145 = vand.u32 %v144, 8388607
    %v146 = vor.u32 %v145, 8388608
    %v147 = vsub.s32 0, %v146
    %v148 = vadd.s32 %v143, 1
    %vm149 = vcmp.gt.s32.totalorder %v148, 0
    %v150 = vsel %vm149, %v148, 0
    %v151 = vshrl.u32 %v150, 5
    %v152 = vand.u32 %v150, 31
    %v153 = vsub.s32 32, %v152
    %v154 = vshrl.u32 683565275, %v153
    %v155 = vshll.u32 683565275, %v152
    %v156 = vshrl.u32 2475754826, %v153
    %v157 = vor.u32 %v155, %v156
    %v158 = vshll.u32 2475754826, %v152
    %v159 = vshrl.u32 2131351028, %v153
    %v160 = vor.u32 %v158, %v159
    %v161 = vshll.u32 2131351028, %v152
    %v162 = vshrl.u32 2102212464, %v153
    %v163 = vor.u32 %v161, %v162
    %v164 = vshll.u32 2102212464, %v152
    %v165 = vshrl.u32 920167782, %v153
    %v166 = vor.u32 %v164, %v165
    %v167 = vshll.u32 920167782, %v152
    %v168 = vshrl.u32 1326507024, %v153
    %v169 = vor.u32 %v167, %v168
    %vm170 = vcmp.lt.s32.totalorder %v151, 1
    %vm171 = vcmp.lt.s32.totalorder %v151, 2
    %vm172 = vcmp.lt.s32.totalorder %v151, 3
    %vm173 = vcmp.lt.s32.totalorder %v151, 4
    %v174 = vsel %vm170, %v154, %v157
    %v175 = vsel %vm173, %v163, 2102212464
    %v176 = vsel %vm172, %v160, %v175
    %v177 = vsel %vm171, %v174, %v176
    %v178 = vsel %vm170, %v157, %v160
    %v179 = vsel %vm173, %v166, 920167782
    %v180 = vsel %vm172, %v163, %v179
    %v181 = vsel %vm171, %v178, %v180
    %v182 = vsel %vm170, %v160, %v163
    %v183 = vsel %vm173, %v169, 1326507024
    %v184 = vsel %vm172, %v166, %v183
    %v185 = vsel %vm171, %v182, %v184
    %v186 = vshll.u32 %v146, 8
    %v187 = vmul.u32.u64.compose %v186, %v185
    %v188 = vextract.low.u32 %v187
    %v189 = vextract.high.u32 %v187
    %v190 = vmul.u32.u64.compose %v186, %v181
    %v191 = vextract.low.u32 %v190
    %v192 = vextract.high.u32 %v190
    %v193 = vmul.u32 %v186, %v177
    %v194 = vadd.s32 %v189, %v191
    %vm195 = vc.u32 %v189, %v191
    %v196 = vadd.s32 %v192, 1
    %v197 = vsel %vm195, %v196, %v192
    %v198 = vadd.s32 %v193, %v197
    %v199 = vadd.s32 %v198, 536870912
    %v200 = vshrl.u32 %v199, 30
    %v201 = vshll.u32 %v200, 30
    %v202 = vsub.s32 %v198, %v201
    %vm203 = vcmp.lt.s32.totalorder %v202, 0
    %v204 = vsub.s32 0, %v202
    %v205 = vsel %vm203, %v204, %v202
    %v206 = vclz %v205
    %v207 = vsub.s32 %v206, 2
    %vm208 = vcmp.gt.s32.totalorder 0, %v207
    %v209 = vsel %vm208, 0, %v207
    %v210 = vsub.s32 32, %v209
    %v211 = vshll.u32 %v202, %v209
    %v212 = vshrl.u32 %v194, %v210
    %v213 = vor.u32 %v211, %v212
    %v214 = vsub.s32 4294967266, %v209
    %v215 = vadd.s32 %v214, 127
    %v216 = vshll.u32 %v215, 23
    %v217 = vor.u32 4788187, %v216
    %v218 = vand.u32 2147483647, %v217
    %v220 = vcvt.s32.f32 %v213
    %v221 = vmul.f32 %v220, %v218
    %v222 = vxor.u32 %v221, 2147483648
    %v223 = vsel %vm140, %v222, %v221
    %v224 = vsub.s32 4, %v200
    %v225 = vsel %vm140, %v224, %v200
    %v226 = vsel %vm139, %v34, %v223
    %v227 = vsel %vm139, 0, %v225
    %v228 = vcosq.f32.pop %v226
    %v229 = vsinq.f32.pop %v226
    %vm230 = vweird.f32 %v34
    %v231 = vadd.s32 %v227, 3
    %v232 = vand.u32 %v231, 3
    %vm233 = vcmp.lt.s32.totalorder %v232, 2
    %vm234 = vcmp.eq.s32.totalorder %v232, 0
    %v235 = vxor.u32 %v229, 2147483648
    %v236 = vsel %vm234, %v228, %v235
    %vm237 = vcmp.eq.s32.totalorder %v232, 2
    %v238 = vxor.u32 %v228, 2147483648
    %v239 = vsel %vm237, %v238, %v229
    %v240 = vsel %vm233, %v236, %v239
    %v241 = vsel %vm230, nan, %v240
    %v242 = vld [vmem:[%s1] sm:$0x3]
    %v243 = vld [vmem:[%s2] sm:$0x3]
    %v245 = vlaneseq
    %v246 = vshrl.u32 %v245, 7
    %v247 = vsub.s32 0, %v246
    %v248 = vrot.slane %v137, %v247
    %v250 = vmul.f32 %v248, %v242
    %v252 = vlaneseq
    %v253 = vshrl.u32 %v252, 7
    %v254 = vsub.s32 0, %v253
    %v255 = vrot.slane %v241, %v254
    %v257 = vmul.f32 %v255, %v243
    %v258 = vsub.f32 %v250, %v257
    %259 = vst [vmem:[#allocation5] sm:$0x3] %v258
    %v260 = vmul.f32 %v255, %v242
    %v261 = vmul.f32 %v248, %v243
    %v262 = vadd.f32 %v260, %v261
    %263 = vst [vmem:[#allocation6] sm:$0x3] %v262
    // Predicated region
    $region18: #{tpu_custom_call.1} parent=1 // pred_check
      _
    $region19: #{tpu_custom_call.1} parent=1 // pred_check_branch
      %265 = sbr.rel (0) target = $region21
    $region20: #{tpu_custom_call.1} parent=1 // pred_region
      %s267 = ssub.s32 32, 32
      %268 = vsyncadd [#allocation4], %s267
      %s270 = sshll.u32 [#allocation5], 4
      %s271 = int_to_ptr.vmem [resolvable:$true] %s270
      %273 = dma.vmem_to_hbm [thread:$0]  %s271, 32, %s3, [#allocation4]
    $region21: #{tpu_custom_call.1} parent=1 // pred_fallthru
      _
    // Predicated region
    $region22: #{tpu_custom_call.1} parent=1 // pred_check
      _
    $region23: #{tpu_custom_call.1} parent=1 // pred_check_branch
      %275 = sbr.rel (0) target = $region25
    $region24: #{tpu_custom_call.1} parent=1 // pred_region
      %s277 = ssub.s32 32, 32
      %278 = vsyncadd [#allocation7], %s277
      %s280 = sshll.u32 [#allocation6], 4
      %s281 = int_to_ptr.vmem [resolvable:$true] %s280
      %283 = dma.vmem_to_hbm [thread:$0]  %s281, 32, %s4, [#allocation7]
    $region25: #{tpu_custom_call.1} parent=1 // pred_fallthru
      _
    // Predicated region
    $region26: #{tpu_custom_call.1} parent=1 // pred_check
      _
    $region27: #{tpu_custom_call.1} parent=1 // pred_check_branch
      %285 = sbr.rel (0) target = $region29
    $region28: #{tpu_custom_call.1} parent=1 // pred_region
      %286 = dma.done [#allocation4], 32
    $region29: #{tpu_custom_call.1} parent=1 // pred_fallthru
      _
    // Predicated region
    $region30: #{tpu_custom_call.1} parent=1 // pred_check
      _
    $region31: #{tpu_custom_call.1} parent=1 // pred_check_branch
      %288 = sbr.rel (0) target = $region33
    $region32: #{tpu_custom_call.1} parent=1 // pred_region
      %289 = dma.done [#allocation7], 32
    $region33: #{tpu_custom_call.1} parent=1 // pred_fallthru
      _
    %290 = vsyncpa [#allocation3], 1
    %291 = vsyncpa [#allocation4], 1
    %292 = vsyncpa [#allocation7], 1

</llo_original>
